<compile_context>
chip_gen: v6e
topology: v6e:2x2x1
jax: 0.10.0
libtpu: 0.0.40
codegen_flags: <defaults>
</compile_context>

<pallas_src>
import functools

import jax
import jax.numpy as jnp
from jax.experimental import pallas as pl
from jax.experimental.pallas import tpu as pltpu


def _round_up(x, m):
    return (x + m - 1) // m * m


def _patch_embed_kernel(patches_ref, w_ref, pos_ref, out_ref):
    """One grid step == one TM-row slab of the fused (B * Np_pad) row dimension.

    patches_ref : (TM, Kp)        bf16 im2col patches (rows fused over batch & patch index)
    w_ref       : (Kp, Dp)        bf16 conv weight (K/lane padded), grid-invariant
    pos_ref     : (pos_rows, Dp)  f32  per-row addend = pos_emb[patch] + conv bias,
                                  grid-invariant (VMEM-resident); pos_rows is TM or Np_pad
    out_ref     : (TM, Dp)        f32  patch tokens
    """
    z = jnp.dot(patches_ref[...], w_ref[...], preferred_element_type=jnp.float32)

    tm = out_ref.shape[0]
    pos_rows = pos_ref.shape[0]
    if pos_rows == tm:
        # Block covers whole images (or exactly one): addend is identical for every block.
        pos = pos_ref[...]
    else:
        # Block is a sub-image slab: slice the resident addend at the within-image offset.
        off = (pl.program_id(0) * tm) % pos_rows
        off = pl.multiple_of(off, tm)            # TM | Np_pad by construction
        pos = pos_ref[pl.ds(off, tm), :]

    out_ref[...] = (z + pos).astype(out_ref.dtype)


def _choose_row_tile(np_pad, batch, target=512):
    """Pick TM (multiple of 16) such that TM | batch*np_pad and (TM | np_pad or np_pad | TM).

    Preference order: (1) at least 2 grid steps so v7x's second TensorCore gets work,
    (2) the largest tile <= target (per-step overhead amortization / HBM roofline).
    """
    total = batch * np_pad
    cands = set()
    for t in range(1, batch + 1):                          # whole images per block
        if batch % t == 0 and t * np_pad <= target:
            cands.add(t * np_pad)
    for d in range(16, min(np_pad, target) + 1, 16):       # sub-image blocks
        if np_pad % d == 0:
            cands.add(d)
    if not cands:                                          # defensive; 16 | np_pad always
        cands.add(np_pad)
    return max(cands, key=lambda tm: ((total // tm) >= 2, tm))


def vit_input_layer(x, conv_w, conv_b, cls_token, pos_emb, *, kernel, stride):
    """x: (B, C, H, W) float32.  Returns (B, num_patch + 1, emb_dim), matching the PyTorch forward."""
    B, C, H, W = x.shape
    D = conv_w.shape[0]
    K = C * kernel * kernel
    Kp = _round_up(K, 128)                                  # unmasked MXU contraction / lane loads
    Dp = _round_up(D, 128)                                  # lane-dense output width (no-op if D%128==0)

    # --- im2col in bf16, feature dim trailing (no transpose pass) -------------------------
    # Feature order of conv_general_dilated_patches is (C, kh, kw) regardless of out spec,
    # which matches conv_w.reshape(D, C*kh*kw) below.
    x_bf16 = x.astype(jnp.bfloat16)
    patches = jax.lax.conv_general_dilated_patches(
        x_bf16, (kernel, kernel), (stride, stride), "VALID",
        dimension_numbers=("NCHW", "OIHW", "NHWC"))         # (B, Hp, Wp, K) bf16
    _, Hp, Wp, _ = patches.shape
    Np = Hp * Wp
    Np_pad = _round_up(Np, 16)                              # bf16 sublane packing

    patches = patches.reshape(B, Np, K)
    patches = jnp.pad(patches, ((0, 0), (0, Np_pad - Np), (0, Kp - K)))
    patches = patches.reshape(B * Np_pad, Kp)

    # Conv weight as (Kp, Dp) bf16, zero-padded on both axes.
    w_mat = conv_w.reshape(D, K).T.astype(jnp.bfloat16)     # (K, D)
    w_mat = jnp.pad(w_mat, ((0, Kp - K), (0, Dp - D)))

    # Fold conv bias + patch positional embedding into one f32 per-row addend.
    pos_patch = pos_emb[0, 1:, :] + conv_b[None, :]         # (Np, D) f32
    pos_patch = jnp.pad(pos_patch, ((0, Np_pad - Np), (0, Dp - D)))   # (Np_pad, Dp)

    TM = _choose_row_tile(Np_pad, B)
    if TM >= Np_pad:                                        # block spans whole images
        pos_slab = jnp.tile(pos_patch, (TM // Np_pad, 1))   # (TM, Dp) — same for every block
    else:                                                   # TM | Np_pad: slice in-kernel
        pos_slab = pos_patch                                # (Np_pad, Dp)
    pos_rows = pos_slab.shape[0]

    grid = (B * Np_pad // TM,)

    # VMEM budget (double-buffer worst case); only raise the scoped limit when needed so the
    # default (v5e 16 MiB / v6e,v7x 32 MiB) stays untouched for small problems.
    est_vmem = (2 * TM * Kp * 2          # patches, bf16
                + 2 * Kp * Dp * 2        # weight, bf16 (grid-invariant, counted conservatively)
                + 2 * pos_rows * Dp * 4  # pos+bias addend, f32 (grid-invariant)
                + 2 * TM * Dp * 4)       # output, f32
    compiler_kwargs = dict(dimension_semantics=("parallel",))
    if est_vmem > (12 << 20):
        compiler_kwargs["vmem_limit_bytes"] = int(min(48 << 20, 2 * est_vmem))

    out = pl.pallas_call(
        _patch_embed_kernel,
        out_shape=jax.ShapeDtypeStruct((B * Np_pad, Dp), jnp.float32),
        grid_spec=pltpu.PrefetchScalarGridSpec(
            num_scalar_prefetch=0,
            grid=grid,
            in_specs=[
                pl.BlockSpec((TM, Kp), lambda m: (m, 0)),        # fused patch rows
                pl.BlockSpec((Kp, Dp), lambda m: (0, 0)),        # weight (grid-invariant)
                pl.BlockSpec((pos_rows, Dp), lambda m: (0, 0)),  # pos+bias (grid-invariant, resident)
            ],
            out_specs=pl.BlockSpec((TM, Dp), lambda m: (m, 0)),
        ),
        compiler_params=pltpu.CompilerParams(**compiler_kwargs),
    )(patches, w_mat, pos_slab)

    # Wrapper-side assembly: slice off padding, prepend the precomputed (cls + pos[0]) row.
    patch_tokens = out.reshape(B, Np_pad, Dp)[:, :Np, :D]
    cls_row = cls_token.reshape(1, D) + pos_emb[0, 0:1, :]                      # (1, D) f32
    cls_rows = jnp.broadcast_to(cls_row[None, :, :], (B, 1, D))
    return jnp.concatenate([cls_rows, patch_tokens], axis=1).astype(x.dtype)    # (B, Np+1, D)


def _reference(x, conv_w, conv_b, cls_token, pos_emb, *, kernel, stride):
    """Pure-JAX f32 reference of the PyTorch forward (correctness check)."""
    z = jax.lax.conv_general_dilated(
        x, conv_w, window_strides=(stride, stride), padding="VALID",
        dimension_numbers=("NCHW", "OIHW", "NCHW"))
    z = z + conv_b[None, :, None, None]
    B, D, Hp, Wp = z.shape
    z = z.reshape(B, D, Hp * Wp).transpose(0, 2, 1)          # (B, Np, D)
    cls = jnp.broadcast_to(cls_token, (B, 1, D))
    z = jnp.concatenate([cls, z], axis=1) + pos_emb
    return z


if __name__ == "__main__":
    # VitInputlayer(is_stride=True) small-shape instance:
    #   in_channels=4, emb_dim=32, num_patch_row=4, image_size=16
    #   -> patch_size = 4, kernel = 4, stride = 2, num_patch = 49
    in_channels = 4
    emb_dim = 32
    num_patch_row = 4
    image_size = 16
    patch_size = image_size // num_patch_row
    stride = patch_size - 2
    kernel = patch_size
    num_patch = int(((image_size - kernel) / stride + 1) ** 2)

    B = 2
    key = jax.random.PRNGKey(0)
    kx, kw, kb, kc, kp = jax.random.split(key, 5)

    x = jax.random.normal(kx, (B, in_channels, image_size, image_size), jnp.float32)
    conv_w = jax.random.normal(kw, (emb_dim, in_channels, kernel, kernel), jnp.float32) * 0.05
    conv_b = jax.random.normal(kb, (emb_dim,), jnp.float32) * 0.05
    cls_token = jax.random.normal(kc, (1, 1, emb_dim), jnp.float32)
    pos_emb = jax.random.normal(kp, (1, num_patch + 1, emb_dim), jnp.float32)

    fn = jax.jit(functools.partial(vit_input_layer, kernel=kernel, stride=stride))
    out = jax.block_until_ready(fn(x, conv_w, conv_b, cls_token, pos_emb))

    ref = _reference(x, conv_w, conv_b, cls_token, pos_emb, kernel=kernel, stride=stride)
    assert out.shape == (B, num_patch + 1, emb_dim), out.shape
    # bf16 im2col + bf16 matmul operands (f32 accumulation) -> loosened tolerance vs f32 ref.
    assert jnp.allclose(out, ref, atol=5e-2, rtol=5e-2), float(jnp.max(jnp.abs(out - ref)))

    print("KERNEL_OK")
</pallas_src>

<mosaic_0001>
module attributes {stable_mosaic.version = 11 : i64} {
  func.func @_patch_embed_kernel(%arg0: i32, %arg1: memref<64x128xbf16, #tpu.memory_space<vmem>>, %arg2: memref<128x128xbf16, #tpu.memory_space<vmem>>, %arg3: memref<64x128xf32, #tpu.memory_space<vmem>>, %arg4: memref<64x128xf32, #tpu.memory_space<vmem>>) attributes {dimension_semantics = [#tpu.dimension_semantics<parallel>], iteration_bounds = array<i64: 2>, scalar_prefetch = 0 : i64, scratch_operands = 0 : i64, tpu.core_type = #tpu.core_type<tc>, window_params = [{transform_indices = @transform_0, window_bounds = array<i64: 64, 128>}, {pipeline_mode = #tpu.pipeline_mode<synchronous>, transform_indices = @transform_1, window_bounds = array<i64: 128, 128>}, {pipeline_mode = #tpu.pipeline_mode<synchronous>, transform_indices = @transform_2, window_bounds = array<i64: 64, 128>}, {transform_indices = @transform_3, window_bounds = array<i64: 64, 128>}]} {
    %c0 = arith.constant 0 : index
    %c0_0 = arith.constant 0 : index
    %0 = vector.load %arg1[%c0, %c0_0] : memref<64x128xbf16, #tpu.memory_space<vmem>>, vector<64x128xbf16>
    %c0_1 = arith.constant 0 : index
    %c0_2 = arith.constant 0 : index
    %1 = vector.load %arg2[%c0_1, %c0_2] : memref<128x128xbf16, #tpu.memory_space<vmem>>, vector<128x128xbf16>
    %cst = arith.constant dense<0.000000e+00> : vector<64x128xf32>
    %2 = tpu.matmul %0, %1, %cst {dimension_numbers = #tpu.dot_dimension_numbers<[1], [0], [0], [1], [0, 0, 1, 1], [], []>} : vector<64x128xbf16>, vector<128x128xbf16>, vector<64x128xf32> -> vector<64x128xf32>
    %c0_3 = arith.constant 0 : index
    %c0_4 = arith.constant 0 : index
    %3 = vector.load %arg3[%c0_3, %c0_4] : memref<64x128xf32, #tpu.memory_space<vmem>>, vector<64x128xf32>
    %4 = arith.addf %2, %3 : vector<64x128xf32>
    %c0_5 = arith.constant 0 : index
    %c0_6 = arith.constant 0 : index
    %5 = vector.load %arg4[%c0_5, %c0_6] : memref<64x128xf32, #tpu.memory_space<vmem>>, vector<64x128xf32>
    tpu.vector_store %arg4[%c0_5, %c0_6], %4 {strides = array<i32>} : memref<64x128xf32, #tpu.memory_space<vmem>>, vector<64x128xf32>,
    return
  }
  func.func @transform_0(%arg0: i32) -> (i32, i32) {
    %c0_i32 = arith.constant 0 : i32
    %c0_i32_0 = arith.constant 0 : i32
    return %arg0, %c0_i32 : i32, i32
  }
  func.func @transform_1(%arg0: i32) -> (i32, i32) {
    %c0_i32 = arith.constant 0 : i32
    %c0_i32_0 = arith.constant 0 : i32
    %c0_i32_1 = arith.constant 0 : i32
    return %c0_i32, %c0_i32_0 : i32, i32
  }
  func.func @transform_2(%arg0: i32) -> (i32, i32) {
    %c0_i32 = arith.constant 0 : i32
    %c0_i32_0 = arith.constant 0 : i32
    %c0_i32_1 = arith.constant 0 : i32
    return %c0_i32, %c0_i32_0 : i32, i32
  }
  func.func @transform_3(%arg0: i32) -> (i32, i32) {
    %c0_i32 = arith.constant 0 : i32
    %c0_i32_0 = arith.constant 0 : i32
    return %arg0, %c0_i32 : i32, i32
  }
}

</mosaic_0001>

<llo_original>
// kernel: vit_input_layer.1
$region0: #{vit_input_layer.1}
  #allocation0 [shape = 'u32[]', space=smem, size = 0x4, offset = 0x4, fixed_abs, tag = 'smem constant byte address 0x4 - core index']
  #allocation1 [shape = 'u32[144,128]{1,0:T(1,128)}', space=vmem, size = 0x12000, scoped, tag = 'internal scratch']
  %s0 = inlined_call_operand.vmem [shape: bf16[128,128], index: 0, kind: input, shape index: {}]
  %s1 = inlined_call_operand.vmem [shape: bf16[128,128], index: 1, kind: input, shape index: {}]
  %s2 = inlined_call_operand.vmem [shape: f32[64,128], index: 2, kind: input, shape index: {}]
  %s3 = inlined_call_operand.vmem [shape: f32[128,128], index: 3, kind: output, shape index: {}]
  %s4 = sld [smem:[#allocation0]]
  $region45: #{vit_input_layer.1} parent=0
    _
  %s6 = ssub.s32 1, %s4
  %s7 = scalar_select 0, %s6, %s4
  loop: start=0, step=1, limit=4
  $region2: #{vit_input_layer.1} parent=0 // loop_pre_header
    _
  $region3: #{vit_input_layer.1} parent=0 // loop_header
    %s9 = sphi 0, %s13
    %p10 = scmp.ge.s32.totalorder %s9, 4
    %s19 = sphi 0, %s21
    %s22 = sphi 0, %s19
    %s23 = sphi 0, %s22
    %s39 = sphi 0, %s23
    %s43 = sphi 0, %s43
    %s45 = sphi 0, %s43
    %s46 = sphi 0, %s45
    %s60 = sphi 0, %s46
    %s64 = sphi 0, %s64
    %s66 = sphi 0, %s64
    %s67 = sphi 0, %s66
    %s81 = sphi 0, %s67
    %s87 = sphi 0, %s89
    %s90 = sphi 0, %s87
    %s91 = sphi 0, %s90
    %s107 = sphi 0, %s91
  $region4: #{vit_input_layer.1} parent=0 // loop_header_branch
    %12 = sbr.rel (%p10) target = $region8
  $region5: #{vit_input_layer.1} parent=0 // loop_body
    %s14 = ssub.s32 %s9, 1
    %s15 = ssub.s32 %s9, 2
    %s16 = sadd.s32 %s9, 1
    %s17 = ssub.s32 %s9, %s16
    %p18 = scmp.eq.s32.totalorder %s17, 0
    %s20 = sadd.s32 %s19, 1
    %s21 = scalar_select %p18, %s19, %s20
    %p24 = pneg %p18
    %p25 = scmp.eq.s32.totalorder %s9, 1
    %p26 = por %p24, %p25
    %p27 = scmp.ne.s32.totalorder %s19, %s22
    %p28 = scmp.eq.s32.totalorder %s9, 0
    %p29 = por %p27, %p28
    %p30 = scmp.ne.s32.totalorder %s19, %s22
    %p31 = scmp.eq.s32.totalorder %s14, 1
    %p32 = por %p30, %p31
    %p33 = scmp.ne.s32.totalorder %s22, %s23
    %p34 = scmp.eq.s32.totalorder %s14, 0
    %p35 = por %p33, %p34
    %p36 = scmp.ne.s32.totalorder %s22, %s23
    %p37 = scmp.eq.s32.totalorder %s15, 1
    %p38 = por %p36, %p37
    %p40 = scmp.ne.s32.totalorder %s23, %s39
    %p41 = scmp.eq.s32.totalorder %s15, 0
    %p42 = por %p40, %p41
    %s44 = sadd.s32 %s43, 1
    %p47 = scmp.eq.s32.totalorder %s9, 1
    %p48 = scmp.ne.s32.totalorder %s43, %s45
    %p49 = scmp.eq.s32.totalorder %s9, 0
    %p50 = por %p48, %p49
    %p51 = scmp.ne.s32.totalorder %s43, %s45
    %p52 = scmp.eq.s32.totalorder %s14, 1
    %p53 = por %p51, %p52
    %p54 = scmp.ne.s32.totalorder %s45, %s46
    %p55 = scmp.eq.s32.totalorder %s14, 0
    %p56 = por %p54, %p55
    %p57 = scmp.ne.s32.totalorder %s45, %s46
    %p58 = scmp.eq.s32.totalorder %s15, 1
    %p59 = por %p57, %p58
    %p61 = scmp.ne.s32.totalorder %s46, %s60
    %p62 = scmp.eq.s32.totalorder %s15, 0
    %p63 = por %p61, %p62
    %s65 = sadd.s32 %s64, 1
    %p68 = scmp.eq.s32.totalorder %s9, 1
    %p69 = scmp.ne.s32.totalorder %s64, %s66
    %p70 = scmp.eq.s32.totalorder %s9, 0
    %p71 = por %p69, %p70
    %p72 = scmp.ne.s32.totalorder %s64, %s66
    %p73 = scmp.eq.s32.totalorder %s14, 1
    %p74 = por %p72, %p73
    %p75 = scmp.ne.s32.totalorder %s66, %s67
    %p76 = scmp.eq.s32.totalorder %s14, 0
    %p77 = por %p75, %p76
    %p78 = scmp.ne.s32.totalorder %s66, %s67
    %p79 = scmp.eq.s32.totalorder %s15, 1
    %p80 = por %p78, %p79
    %p82 = scmp.ne.s32.totalorder %s67, %s81
    %p83 = scmp.eq.s32.totalorder %s15, 0
    %p84 = por %p82, %p83
    %s85 = ssub.s32 %s9, %s16
    %p86 = scmp.eq.s32.totalorder %s85, 0
    %s88 = sadd.s32 %s87, 1
    %s89 = scalar_select %p86, %s87, %s88
    %p92 = pneg %p86
    %p93 = scmp.eq.s32.totalorder %s9, 1
    %p94 = por %p92, %p93
    %p95 = scmp.ne.s32.totalorder %s87, %s90
    %p96 = scmp.eq.s32.totalorder %s9, 0
    %p97 = por %p95, %p96
    %p98 = scmp.ne.s32.totalorder %s87, %s90
    %p99 = scmp.eq.s32.totalorder %s14, 1
    %p100 = por %p98, %p99
    %p101 = scmp.ne.s32.totalorder %s90, %s91
    %p102 = scmp.eq.s32.totalorder %s14, 0
    %p103 = por %p101, %p102
    %p104 = scmp.ne.s32.totalorder %s90, %s91
    %p105 = scmp.eq.s32.totalorder %s15, 1
    %p106 = por %p104, %p105
    %p108 = scmp.ne.s32.totalorder %s91, %s107
    %p109 = scmp.eq.s32.totalorder %s15, 0
    %p110 = por %p108, %p109
    %p111 = scmp.le.s32.totalorder 1, %s9
    %p112 = scmp.lt.s32.totalorder %s9, 3
    %p113 = pnand %p111, %p112
    %p114 = pneg %p113
    // Predicated region
    $region9: #{vit_input_layer.1} parent=5 // pred_check
      _
    $region10: #{vit_input_layer.1} parent=5 // pred_check_branch
      %116 = sbr.rel (%p113) target = $region12
    $region11: #{vit_input_layer.1} parent=5 // pred_region
      %s117 = ssub.s32 %s9, 1
      // Predicated region
      $region13: #{vit_input_layer.1} parent=11 // pred_check
        %p118 = pneg %p56
      $region14: #{vit_input_layer.1} parent=11 // pred_check_branch
        %120 = sbr.rel (%p118) target = $region16
      $region15: #{vit_input_layer.1} parent=11 // pred_region
        _
      $region16: #{vit_input_layer.1} parent=11 // pred_fallthru
        _
      // Predicated region
      $region17: #{vit_input_layer.1} parent=11 // pred_check
        %p121 = pneg %p77
      $region18: #{vit_input_layer.1} parent=11 // pred_check_branch
        %123 = sbr.rel (%p121) target = $region20
      $region19: #{vit_input_layer.1} parent=11 // pred_region
        _
      $region20: #{vit_input_layer.1} parent=11 // pred_fallthru
        _
    $region12: #{vit_input_layer.1} parent=5 // pred_fallthru
      _
    %p124 = scmp.lt.s32.totalorder %s9, 2
    // Predicated region
    $region21: #{vit_input_layer.1} parent=5 // pred_check
      %p125 = pneg %p124
    $region22: #{vit_input_layer.1} parent=5 // pred_check_branch
      %127 = sbr.rel (%p125) target = $region24
    $region23: #{vit_input_layer.1} parent=5 // pred_region
      // Predicated region
      $region25: #{vit_input_layer.1} parent=23 // pred_check
        %p128 = pneg %p29
      $region26: #{vit_input_layer.1} parent=23 // pred_check_branch
        %130 = sbr.rel (%p128) target = $region28
      $region27: #{vit_input_layer.1} parent=23 // pred_region
        %s131 = smul.u32 8, %s9
        %p132 = scmp.lt.s32.totalorder %s131, 15
        %s133 = scalar_select %p132, %s131, 15
        %s134 = smul.addr %s133, 4
        %s135 = scalar_lea.vmem %s0, %s134
        %s136 = smul.u32 8, %s9
      $region28: #{vit_input_layer.1} parent=23 // pred_fallthru
        _
    $region24: #{vit_input_layer.1} parent=5 // pred_fallthru
      _
    %p137 = scmp.le.s32.totalorder 1, %s9
    %p138 = scmp.lt.s32.totalorder %s9, 3
    %p139 = pnand %p137, %p138
    %p140 = pneg %p139
    // Predicated region
    $region29: #{vit_input_layer.1} parent=5 // pred_check
      _
    $region30: #{vit_input_layer.1} parent=5 // pred_check_branch
      %142 = sbr.rel (%p139) target = $region32
    $region31: #{vit_input_layer.1} parent=5 // pred_region
      %s143 = ssub.s32 %s9, 1
      %s144 = smul.u32 8, %s14
      %p145 = scmp.lt.s32.totalorder %s144, 15
      %s146 = scalar_select %p145, %s144, 15
      %s147 = smul.addr %s146, 4
      %s148 = scalar_lea.vmem %s0, %s147
      %p149 = pneg %p35
      %p150 = pneg %p32
      %p151 = pneg %p56
      %p152 = pneg %p53
      %p153 = pneg %p77
      %p154 = pneg %p74
      %p155 = pneg %p103
      %p156 = pneg %p100
      %s157 = smul.u32 8, %s14
      %p158 = scmp.lt.s32.totalorder %s157, 15
      %s159 = scalar_select %p158, %s157, 15
      %s160 = smul.addr %s159, 8
      %s161 = scalar_lea.vmem %s3, %s160
      %s162 = smul.u32 8, %s14
      %p163 = scmp.lt.s32.totalorder %s162, 15
      %s164 = scalar_select %p163, %s162, 15
      %s165 = smul.addr %s164, 4
      %s166 = scalar_lea.vmem %s0, %s165
      %s167 = smul.u32 8, %s14
      %s168 = smul.u32 8, %s14
      %p169 = scmp.lt.s32.totalorder %s168, 15
      %s170 = scalar_select %p169, %s168, 15
      %s171 = smul.addr %s170, 8
      %s172 = scalar_lea.vmem %s3, %s171
      %s173 = smul.u32 8, %s14
      %v175 = vld [vmem:[%s166] sm:$0xf]
      %v176 = vld [vmem:[%s166 + $0x4] sm:$0xf]
      %v177 = vld [vmem:[%s166 + $0x8] sm:$0xf]
      %v178 = vld [vmem:[%s166 + $0xc] sm:$0xf]
      %v179 = vld [vmem:[%s166 + $0x10] sm:$0xf]
      %v180 = vld [vmem:[%s166 + $0x14] sm:$0xf]
      %v181 = vld [vmem:[%s166 + $0x18] sm:$0xf]
      %v182 = vld [vmem:[%s166 + $0x1c] sm:$0xf]
      %v183 = vld [vmem:[%s1] sm:$0xf]
      %v184 = vld [vmem:[%s1 + $0x4] sm:$0xf]
      %v185 = vld [vmem:[%s1 + $0x8] sm:$0xf]
      %v186 = vld [vmem:[%s1 + $0xc] sm:$0xf]
      %v187 = vld [vmem:[%s1 + $0x10] sm:$0xf]
      %v188 = vld [vmem:[%s1 + $0x14] sm:$0xf]
      %v189 = vld [vmem:[%s1 + $0x18] sm:$0xf]
      %v190 = vld [vmem:[%s1 + $0x1c] sm:$0xf]
      %v191 = vld [vmem:[%s1 + $0x20] sm:$0xf]
      %v192 = vld [vmem:[%s1 + $0x24] sm:$0xf]
      %v193 = vld [vmem:[%s1 + $0x28] sm:$0xf]
      %v194 = vld [vmem:[%s1 + $0x2c] sm:$0xf]
      %v195 = vld [vmem:[%s1 + $0x30] sm:$0xf]
      %v196 = vld [vmem:[%s1 + $0x34] sm:$0xf]
      %v197 = vld [vmem:[%s1 + $0x38] sm:$0xf]
      %v198 = vld [vmem:[%s1 + $0x3c] sm:$0xf]
      %v199 = vld [vmem:[%s2] sm:$0xff]
      %v200 = vld [vmem:[%s2 + $0x8] sm:$0xff]
      %v201 = vld [vmem:[%s2 + $0x10] sm:$0xff]
      %v202 = vld [vmem:[%s2 + $0x18] sm:$0xff]
      %v203 = vld [vmem:[%s2 + $0x20] sm:$0xff]
      %v204 = vld [vmem:[%s2 + $0x28] sm:$0xff]
      %v205 = vld [vmem:[%s2 + $0x30] sm:$0xff]
      %v206 = vld [vmem:[%s2 + $0x38] sm:$0xff]
      %v215 = vunpack.c.l.b16 %v175
      %v216 = vunpack.c.l.b16 %v176
      %v217 = vunpack.c.l.b16 %v177
      %v218 = vunpack.c.l.b16 %v178
      %v219 = vunpack.c.l.b16 %v179
      %v220 = vunpack.c.l.b16 %v180
      %v221 = vunpack.c.l.b16 %v181
      %v222 = vunpack.c.l.b16 %v182
      %v223 = vpack.c.b16 %v216, %v215
      %v224 = vpack.c.b16 %v218, %v217
      %v225 = vpack.c.b16 %v220, %v219
      %v226 = vpack.c.b16 %v222, %v221
      %v247 = vunpack.c.l.b16 %v183
      %v248 = vunpack.c.l.b16 %v184
      %v249 = vunpack.c.l.b16 %v185
      %v250 = vunpack.c.l.b16 %v186
      %v251 = vunpack.c.l.b16 %v187
      %v252 = vunpack.c.l.b16 %v188
      %v253 = vunpack.c.l.b16 %v189
      %v254 = vunpack.c.l.b16 %v190
      %v255 = vunpack.c.l.b16 %v191
      %v256 = vunpack.c.l.b16 %v192
      %v257 = vunpack.c.l.b16 %v193
      %v258 = vunpack.c.l.b16 %v194
      %v259 = vunpack.c.l.b16 %v195
      %v260 = vunpack.c.l.b16 %v196
      %v261 = vunpack.c.l.b16 %v197
      %v262 = vunpack.c.l.b16 %v198
      %v263 = vpack.c.b16 %v248, %v247
      %v264 = vpack.c.b16 %v250, %v249
      %v265 = vpack.c.b16 %v252, %v251
      %v266 = vpack.c.b16 %v254, %v253
      %v267 = vpack.c.b16 %v256, %v255
      %v268 = vpack.c.b16 %v258, %v257
      %v269 = vpack.c.b16 %v260, %v259
      %v270 = vpack.c.b16 %v262, %v261
      %279 = vmatprep.subr.bf16.mxu0 0
      %280 = vmatpush1.bf16.msra.mxu0 %v270
      %281 = vmatprep.subr.bf16.mxu0 0
      %282 = vmatpush1.bf16.msra.mxu0 %v269
      %283 = vmatprep.subr.bf16.mxu0 0
      %284 = vmatpush1.bf16.msra.mxu0 %v268
      %285 = vmatprep.subr.bf16.mxu0 0
      %286 = vmatpush1.bf16.msra.mxu0 %v267
      %287 = vmatprep.subr.bf16.mxu0 0
      %288 = vmatpush1.bf16.msra.mxu0 %v266
      %289 = vmatprep.subr.bf16.mxu0 0
      %290 = vmatpush1.bf16.msra.mxu0 %v265
      %291 = vmatprep.subr.bf16.mxu0 0
      %292 = vmatpush1.bf16.msra.mxu0 %v264
      %293 = vmatprep.subr.bf16.mxu0 0
      %294 = vmatpush1.bf16.msra.mxu0 %v263
      %295 = vmatprep.subr.bf16.mxu0 0
      %296 = vmatpush2.bf16.msra.mxu0 0
      %297 = vmatprep.subr.bf16.mxu0 0
      %298 = vmatpush2.bf16.msra.mxu0 0
      %299 = vmatprep.subr.bf16.mxu0 0
      %300 = vmatpush2.bf16.msra.mxu0 0
      %301 = vmatprep.subr.bf16.mxu0 0
      %302 = vmatpush2.bf16.msra.mxu0 0
      %303 = vmatprep.subr.bf16.mxu0 0
      %304 = vmatpush2.bf16.msra.mxu0 0
      %305 = vmatprep.subr.bf16.mxu0 0
      %306 = vmatpush2.bf16.msra.mxu0 0
      %307 = vmatprep.subr.bf16.mxu0 0
      %308 = vmatpush2.bf16.msra.mxu0 0
      %309 = vmatprep.subr.bf16.mxu0 0
      %310 = vmatpush2.bf16.msra.mxu0 0
      %311 = vmatprep.mubr.bf16.mxu0 0
      %312 = vmatmul.mubr.bf16.gmra.mxu0 %v223
      %v313 = vpop.f32.mrf.mxu0
      %v314 = vadd.f32 %v199, %v313
      %v315 = vpop.f32.mrf.mxu0
      %v316 = vpop.f32.mrf.mxu0
      %v317 = vadd.f32 %v200, %v316
      %v318 = vpop.f32.mrf.mxu0
      %319 = vmatprep.mubr.bf16.mxu0 0
      %320 = vmatmul.mubr.bf16.gmra.mxu0 %v224
      %v321 = vpop.f32.mrf.mxu0
      %v322 = vadd.f32 %v201, %v321
      %v323 = vpop.f32.mrf.mxu0
      %v324 = vpop.f32.mrf.mxu0
      %v325 = vadd.f32 %v202, %v324
      %v326 = vpop.f32.mrf.mxu0
      %327 = vmatprep.mubr.bf16.mxu0 0
      %328 = vmatmul.mubr.bf16.gmra.mxu0 %v225
      %v329 = vpop.f32.mrf.mxu0
      %v330 = vadd.f32 %v203, %v329
      %v331 = vpop.f32.mrf.mxu0
      %v332 = vpop.f32.mrf.mxu0
      %v333 = vadd.f32 %v204, %v332
      %v334 = vpop.f32.mrf.mxu0
      %335 = vmatprep.mubr.bf16.mxu0 0
      %336 = vmatmul.mubr.bf16.gmra.mxu0 %v226
      %v337 = vpop.f32.mrf.mxu0
      %v338 = vadd.f32 %v205, %v337
      %v339 = vpop.f32.mrf.mxu0
      %v340 = vpop.f32.mrf.mxu0
      %v341 = vadd.f32 %v206, %v340
      %v342 = vpop.f32.mrf.mxu0
      %343 = vdwg.mxu0
      %344 = vst [vmem:[%s172] sm:$0xff] %v314
      %345 = vst [vmem:[%s172 + $0x8] sm:$0xff] %v317
      %346 = vst [vmem:[%s172 + $0x10] sm:$0xff] %v322
      %347 = vst [vmem:[%s172 + $0x18] sm:$0xff] %v325
      %348 = vst [vmem:[%s172 + $0x20] sm:$0xff] %v330
      %349 = vst [vmem:[%s172 + $0x28] sm:$0xff] %v333
      %350 = vst [vmem:[%s172 + $0x30] sm:$0xff] %v338
      %351 = vst [vmem:[%s172 + $0x38] sm:$0xff] %v341
      %s352 = smul.u32 8, %s14
      %p353 = scmp.lt.s32.totalorder %s352, 15
      %s354 = scalar_select %p353, %s352, 15
      %s355 = smul.addr %s354, 8
      %s356 = scalar_lea.vmem %s3, %s355
      // Predicated region
      $region33: #{vit_input_layer.1} parent=31 // pred_check
        %p357 = pneg %p100
      $region34: #{vit_input_layer.1} parent=31 // pred_check_branch
        %359 = sbr.rel (%p357) target = $region36
      $region35: #{vit_input_layer.1} parent=31 // pred_region
        %s360 = smul.u32 8, %s14
      $region36: #{vit_input_layer.1} parent=31 // pred_fallthru
        _
    $region32: #{vit_input_layer.1} parent=5 // pred_fallthru
      _
    %p361 = scmp.le.s32.totalorder 2, %s9
    // Predicated region
    $region37: #{vit_input_layer.1} parent=5 // pred_check
      %p362 = pneg %p361
    $region38: #{vit_input_layer.1} parent=5 // pred_check_branch
      %364 = sbr.rel (%p362) target = $region40
    $region39: #{vit_input_layer.1} parent=5 // pred_region
      %s365 = ssub.s32 %s9, 2
      // Predicated region
      $region41: #{vit_input_layer.1} parent=39 // pred_check
        %p366 = pneg %p106
      $region42: #{vit_input_layer.1} parent=39 // pred_check_branch
        %368 = sbr.rel (%p366) target = $region44
      $region43: #{vit_input_layer.1} parent=39 // pred_region
        %s369 = smul.u32 8, %s15
        %p370 = scmp.lt.s32.totalorder %s369, 15
        %s371 = scalar_select %p370, %s369, 15
        %s372 = smul.addr %s371, 8
        %s373 = scalar_lea.vmem %s3, %s372
      $region44: #{vit_input_layer.1} parent=39 // pred_fallthru
        _
    $region40: #{vit_input_layer.1} parent=5 // pred_fallthru
      _
  $region6: #{vit_input_layer.1} parent=0 // loop_footer
    %s13 = sadd.s32 1, %s9
  $region7: #{vit_input_layer.1} parent=0 // loop_footer_branch
    %8 = sbr.rel target = $region3
  $region8: #{vit_input_layer.1} parent=0 // loop_exit
    _

</llo_original>
